<compile_context>
chip_gen: v7x
topology: tpu7x:2x2x1
jax: 0.10.0
libtpu: 0.0.40
codegen_flags: <defaults>
</compile_context>

<pallas_src>
import functools

import jax
import jax.numpy as jnp
from jax.experimental import pallas as pl
from jax.experimental.pallas import tpu as pltpu

EPS = 1e-5
LANES = 128        # vreg lane width
SUBLANES = 8       # f32 vreg sublane count
MAX_TILE_B = 1024  # batch-tile target (big tiles amortize per-step overhead)
VMEM_TILE_BUDGET = 6 * 1024 * 1024  # per-buffer-set budget; x2 for double buffering


def _cdiv(a, b):
    return -(-a // b)


def _round_up(a, b):
    return _cdiv(a, b) * b


def _choose_tile_b(batch, f_dim, npad):
    """Largest 8-aligned batch tile that keeps the double-buffered VMEM footprint small."""
    bytes_per_row = (2 * f_dim + npad) * 4            # x tile + y tile + out tile (f32)
    cap_rows = VMEM_TILE_BUDGET // (2 * bytes_per_row)
    cap_rows = max(SUBLANES, (cap_rows // SUBLANES) * SUBLANES)
    target = min(MAX_TILE_B, cap_rows)
    if batch <= target:
        return _round_up(batch, SUBLANES)
    n_tiles = _cdiv(batch, target)
    return _round_up(_cdiv(batch, n_tiles), SUBLANES)


def _fusion_kernel(x_ref, y_ref, w_ref, gamma_ref, beta_ref, o_ref,
                   sum_sc, sumsq_sc, *, batch, tile_b, rows_padded):
    """grid = (pass, batch_tile).  pass 0: accumulate stats, pass 1: normalize + write."""
    p = pl.program_id(0)
    bt = pl.program_id(1)

    # Fused add + linear on the MXU.  The Linear bias is omitted on purpose:
    # BatchNorm's mean subtraction cancels it exactly (see file header).
    s = x_ref[...] + y_ref[...]
    z = jnp.dot(s, w_ref[...], preferred_element_type=jnp.float32)

    @pl.when((p == 0) & (bt == 0))
    def _init():
        sum_sc[...] = jnp.zeros_like(sum_sc)
        sumsq_sc[...] = jnp.zeros_like(sumsq_sc)

    @pl.when(p == 0)
    def _accumulate():
        if rows_padded:
            # Rows past the true batch are zero padding -> exclude from statistics.
            row = bt * tile_b + jax.lax.broadcasted_iota(jnp.int32, (tile_b, 1), 0)
            zm = jnp.where(row < batch, z, 0.0)
        else:
            zm = z
        sum_sc[...] += jnp.sum(zm, axis=0, keepdims=True)
        sumsq_sc[...] += jnp.sum(zm * zm, axis=0, keepdims=True)

    @pl.when((p == 1) & (bt == 0))
    def _finalize_stats():
        inv_n = jnp.float32(1.0 / batch)
        mean = sum_sc[...] * inv_n
        var = sumsq_sc[...] * inv_n - mean * mean        # biased variance (PyTorch BN)
        scale = gamma_ref[...] * jax.lax.rsqrt(var + EPS)
        shift = beta_ref[...] - mean * scale
        sum_sc[...] = scale      # scratch reuse: sum   -> scale
        sumsq_sc[...] = shift    # scratch reuse: sumsq -> shift

    @pl.when(p == 1)
    def _normalize_and_write():
        o_ref[...] = jnp.tanh(z * sum_sc[...] + sumsq_sc[...]).astype(o_ref.dtype)


def fusion_forward(x, y, w, b, gamma, beta):
    """x, y: [B, F]; w: [F, nbit]; b/gamma/beta: [nbit] or [1, nbit] -> [B, nbit].

    `b` (the Linear bias) is accepted for parameter-fidelity with the PyTorch
    module but is not consumed: under training-mode BatchNorm it cancels exactly
    out of the forward output.
    """
    del b  # exact cancellation under batch-stat normalization (see header comment)

    B, F = x.shape
    nbit = w.shape[1]

    npad = _round_up(nbit, LANES)                 # lane-dense last dim (multiple of 128)
    tile_b = _choose_tile_b(B, F, npad)
    nb_tiles = _cdiv(B, tile_b)
    b_pad = nb_tiles * tile_b
    rows_padded = b_pad != B

    f32 = jnp.float32

    def pad_rows(a):
        a = a.astype(f32)
        return jnp.pad(a, ((0, b_pad - B), (0, 0))) if rows_padded else a

    def pad_cols(a):
        a = a.reshape(1, -1).astype(f32)
        return jnp.pad(a, ((0, 0), (0, npad - nbit))) if npad != nbit else a

    x_p, y_p = pad_rows(x), pad_rows(y)
    w_p = w.astype(f32)
    if npad != nbit:
        w_p = jnp.pad(w_p, ((0, 0), (0, npad - nbit)))
    g_p, beta_p = pad_cols(gamma), pad_cols(beta)

    kernel = functools.partial(_fusion_kernel, batch=B, tile_b=tile_b,
                               rows_padded=rows_padded)

    out_padded = pl.pallas_call(
        kernel,
        out_shape=jax.ShapeDtypeStruct((b_pad, npad), jnp.float32),
        grid_spec=pltpu.PrefetchScalarGridSpec(
            num_scalar_prefetch=0,
            grid=(2, nb_tiles),                                   # (pass, batch tile)
            in_specs=[
                pl.BlockSpec((tile_b, F), lambda p, i: (i, 0)),   # x
                pl.BlockSpec((tile_b, F), lambda p, i: (i, 0)),   # y
                pl.BlockSpec((F, npad), lambda p, i: (0, 0)),     # w (resident across grid)
                pl.BlockSpec((1, npad), lambda p, i: (0, 0)),     # gamma
                pl.BlockSpec((1, npad), lambda p, i: (0, 0)),     # beta
            ],
            # Pass 0 keeps the output pinned to block 0 (never written), so no
            # garbage tile is flushed; pass 1 writes each tile exactly once.
            out_specs=pl.BlockSpec((tile_b, npad), lambda p, i: (i * p, 0)),
            scratch_shapes=[
                pltpu.VMEM((1, npad), jnp.float32),   # sum   -> scale
                pltpu.VMEM((1, npad), jnp.float32),   # sumsq -> shift
            ],
        ),
        compiler_params=pltpu.CompilerParams(
            # Both axes carry dependencies (stats accumulation in scratch / pass
            # ordering), so both stay "arbitrary".  To use both v7x TensorCores at
            # scale, pack independent fusion heads along the padded 128-lane axis
            # and add a "parallel" column-tile grid axis.
            dimension_semantics=("arbitrary", "arbitrary")),
    )(x_p, y_p, w_p, g_p, beta_p)

    return out_padded[:B, :nbit]


def fusion_reference(x, y, w, b, gamma, beta):
    """Pure-JAX reference (PyTorch Fusion forward in training mode, bias included)."""
    z = (x + y) @ w + b.reshape(1, -1)
    mean = jnp.mean(z, axis=0, keepdims=True)
    var = jnp.mean((z - mean) ** 2, axis=0, keepdims=True)
    z_hat = (z - mean) / jnp.sqrt(var + EPS)
    return jnp.tanh(z_hat * gamma.reshape(1, -1) + beta.reshape(1, -1))


if __name__ == "__main__":
    FUSION_DIM, NBIT = 32, 16

    key = jax.random.PRNGKey(0)
    kw, kb, kg, kbeta, kd = jax.random.split(key, 5)

    # Deterministic synthetic params mirroring nn.Linear(F, nbit) + nn.BatchNorm1d(nbit).
    bound = 1.0 / (FUSION_DIM ** 0.5)
    w = jax.random.uniform(kw, (FUSION_DIM, NBIT), jnp.float32, -bound, bound)
    b = jax.random.uniform(kb, (1, NBIT), jnp.float32, -bound, bound)
    gamma = 1.0 + 0.1 * jax.random.normal(kg, (1, NBIT), dtype=jnp.float32)
    beta = 0.1 * jax.random.normal(kbeta, (1, NBIT), dtype=jnp.float32)

    # Small shape consistent with the module (batch=8).
    kx, ky, kx2, ky2 = jax.random.split(kd, 4)
    x = jax.random.normal(kx, (8, FUSION_DIM), dtype=jnp.float32)
    y = jax.random.normal(ky, (8, FUSION_DIM), dtype=jnp.float32)

    out = jax.block_until_ready(fusion_forward(x, y, w, b, gamma, beta))
    ref = fusion_reference(x, y, w, b, gamma, beta)
    assert out.shape == (8, NBIT)
    assert jnp.allclose(out, ref, atol=2e-5, rtol=1e-5)

    # Second check exercising the multi-tile two-pass path with row padding
    # (B > tile target and not a multiple of the tile size).
    B2 = 2500
    x2 = jax.random.normal(kx2, (B2, FUSION_DIM), dtype=jnp.float32)
    y2 = jax.random.normal(ky2, (B2, FUSION_DIM), dtype=jnp.float32)
    out2 = jax.block_until_ready(fusion_forward(x2, y2, w, b, gamma, beta))
    ref2 = fusion_reference(x2, y2, w, b, gamma, beta)
    assert out2.shape == (B2, NBIT)
    assert jnp.allclose(out2, ref2, atol=2e-5, rtol=1e-5)

    print("KERNEL_OK")
</pallas_src>

<mosaic_0001>
module attributes {stable_mosaic.version = 11 : i64} {
  func.func @_fusion_kernel(%arg0: i32, %arg1: i32, %arg2: memref<8x32xf32, #tpu.memory_space<vmem>>, %arg3: memref<8x32xf32, #tpu.memory_space<vmem>>, %arg4: memref<32x128xf32, #tpu.memory_space<vmem>>, %arg5: memref<1x128xf32, #tpu.memory_space<vmem>>, %arg6: memref<1x128xf32, #tpu.memory_space<vmem>>, %arg7: memref<8x128xf32, #tpu.memory_space<vmem>>, %arg8: memref<1x128xf32, #tpu.memory_space<vmem>>, %arg9: memref<1x128xf32, #tpu.memory_space<vmem>>) attributes {dimension_semantics = [#tpu.dimension_semantics<arbitrary>, #tpu.dimension_semantics<arbitrary>], iteration_bounds = array<i64: 2, 1>, scalar_prefetch = 0 : i64, scratch_operands = 2 : i64, tpu.core_type = #tpu.core_type<tc>, window_params = [{transform_indices = @transform_0, window_bounds = array<i64: 8, 32>}, {transform_indices = @transform_1, window_bounds = array<i64: 8, 32>}, {pipeline_mode = #tpu.pipeline_mode<synchronous>, transform_indices = @transform_2, window_bounds = array<i64: 32, 128>}, {pipeline_mode = #tpu.pipeline_mode<synchronous>, transform_indices = @transform_3, window_bounds = array<i64: 1, 128>}, {pipeline_mode = #tpu.pipeline_mode<synchronous>, transform_indices = @transform_4, window_bounds = array<i64: 1, 128>}, {transform_indices = @transform_5, window_bounds = array<i64: 8, 128>}]} {
    %c0 = arith.constant 0 : index
    %c0_0 = arith.constant 0 : index
    %0 = vector.load %arg2[%c0, %c0_0] : memref<8x32xf32, #tpu.memory_space<vmem>>, vector<8x32xf32>
    %c0_1 = arith.constant 0 : index
    %c0_2 = arith.constant 0 : index
    %1 = vector.load %arg3[%c0_1, %c0_2] : memref<8x32xf32, #tpu.memory_space<vmem>>, vector<8x32xf32>
    %2 = arith.addf %0, %1 : vector<8x32xf32>
    %c0_3 = arith.constant 0 : index
    %c0_4 = arith.constant 0 : index
    %3 = vector.load %arg4[%c0_3, %c0_4] : memref<32x128xf32, #tpu.memory_space<vmem>>, vector<32x128xf32>
    %cst = arith.constant dense<0.000000e+00> : vector<8x128xf32>
    %4 = tpu.matmul %2, %3, %cst {dimension_numbers = #tpu.dot_dimension_numbers<[1], [0], [0], [1], [0, 0, 1, 1], [], []>} : vector<8x32xf32>, vector<32x128xf32>, vector<8x128xf32> -> vector<8x128xf32>
    %c0_i32 = arith.constant 0 : i32
    %5 = arith.cmpi eq, %arg0, %c0_i32 : i32
    %c0_i32_5 = arith.constant 0 : i32
    %6 = arith.cmpi eq, %arg1, %c0_i32_5 : i32
    %7 = arith.andi %5, %6 : i1
    %8 = arith.extui %7 : i1 to i32
    %c0_i32_6 = arith.constant 0 : i32
    %9 = arith.cmpi ne, %8, %c0_i32_6 : i32
    scf.if %9 {
      %cst_13 = arith.constant 0.000000e+00 : f32
      %21 = vector.broadcast %cst_13 : f32 to vector<1x128xf32>
      %c0_14 = arith.constant 0 : index
      %c0_15 = arith.constant 0 : index
      %22 = vector.load %arg8[%c0_14, %c0_15] : memref<1x128xf32, #tpu.memory_space<vmem>>, vector<1x128xf32>
      tpu.vector_store %arg8[%c0_14, %c0_15], %21 {strides = array<i32>} : memref<1x128xf32, #tpu.memory_space<vmem>>, vector<1x128xf32>,
      %cst_16 = arith.constant 0.000000e+00 : f32
      %23 = vector.broadcast %cst_16 : f32 to vector<1x128xf32>
      %c0_17 = arith.constant 0 : index
      %c0_18 = arith.constant 0 : index
      %24 = vector.load %arg9[%c0_17, %c0_18] : memref<1x128xf32, #tpu.memory_space<vmem>>, vector<1x128xf32>
      tpu.vector_store %arg9[%c0_17, %c0_18], %23 {strides = array<i32>} : memref<1x128xf32, #tpu.memory_space<vmem>>, vector<1x128xf32>,
    } else {
    }
    %c0_i32_7 = arith.constant 0 : i32
    %10 = arith.cmpi eq, %arg0, %c0_i32_7 : i32
    %11 = arith.extui %10 : i1 to i32
    %c0_i32_8 = arith.constant 0 : i32
    %12 = arith.cmpi ne, %11, %c0_i32_8 : i32
    scf.if %12 {
      %c0_13 = arith.constant 0 : index
      %c0_14 = arith.constant 0 : index
      %21 = vector.load %arg8[%c0_13, %c0_14] : memref<1x128xf32, #tpu.memory_space<vmem>>, vector<1x128xf32>
      %cst_15 = arith.constant dense<0.000000e+00> : vector<128xf32>
      %22 = vector.multi_reduction <add>, %4, %cst_15 [0] : vector<8x128xf32> to vector<128xf32>
      %23 = vector.shape_cast %22 : vector<128xf32> to vector<1x128xf32>
      %24 = arith.addf %21, %23 : vector<1x128xf32>
      %c0_16 = arith.constant 0 : index
      %c0_17 = arith.constant 0 : index
      %25 = vector.load %arg8[%c0_16, %c0_17] : memref<1x128xf32, #tpu.memory_space<vmem>>, vector<1x128xf32>
      tpu.vector_store %arg8[%c0_16, %c0_17], %24 {strides = array<i32>} : memref<1x128xf32, #tpu.memory_space<vmem>>, vector<1x128xf32>,
      %c0_18 = arith.constant 0 : index
      %c0_19 = arith.constant 0 : index
      %26 = vector.load %arg9[%c0_18, %c0_19] : memref<1x128xf32, #tpu.memory_space<vmem>>, vector<1x128xf32>
      %27 = arith.mulf %4, %4 : vector<8x128xf32>
      %cst_20 = arith.constant dense<0.000000e+00> : vector<128xf32>
      %28 = vector.multi_reduction <add>, %27, %cst_20 [0] : vector<8x128xf32> to vector<128xf32>
      %29 = vector.shape_cast %28 : vector<128xf32> to vector<1x128xf32>
      %30 = arith.addf %26, %29 : vector<1x128xf32>
      %c0_21 = arith.constant 0 : index
      %c0_22 = arith.constant 0 : index
      %31 = vector.load %arg9[%c0_21, %c0_22] : memref<1x128xf32, #tpu.memory_space<vmem>>, vector<1x128xf32>
      tpu.vector_store %arg9[%c0_21, %c0_22], %30 {strides = array<i32>} : memref<1x128xf32, #tpu.memory_space<vmem>>, vector<1x128xf32>,
    } else {
    }
    %c1_i32 = arith.constant 1 : i32
    %13 = arith.cmpi eq, %arg0, %c1_i32 : i32
    %c0_i32_9 = arith.constant 0 : i32
    %14 = arith.cmpi eq, %arg1, %c0_i32_9 : i32
    %15 = arith.andi %13, %14 : i1
    %16 = arith.extui %15 : i1 to i32
    %c0_i32_10 = arith.constant 0 : i32
    %17 = arith.cmpi ne, %16, %c0_i32_10 : i32
    scf.if %17 {
      %c0_13 = arith.constant 0 : index
      %c0_14 = arith.constant 0 : index
      %21 = vector.load %arg8[%c0_13, %c0_14] : memref<1x128xf32, #tpu.memory_space<vmem>>, vector<1x128xf32>
      %cst_15 = arith.constant 1.250000e-01 : f32
      %22 = vector.broadcast %cst_15 : f32 to vector<1x128xf32>
      %23 = arith.mulf %21, %22 : vector<1x128xf32>
      %c0_16 = arith.constant 0 : index
      %c0_17 = arith.constant 0 : index
      %24 = vector.load %arg9[%c0_16, %c0_17] : memref<1x128xf32, #tpu.memory_space<vmem>>, vector<1x128xf32>
      %cst_18 = arith.constant 1.250000e-01 : f32
      %25 = vector.broadcast %cst_18 : f32 to vector<1x128xf32>
      %26 = arith.mulf %24, %25 : vector<1x128xf32>
      %27 = arith.mulf %23, %23 : vector<1x128xf32>
      %28 = arith.subf %26, %27 : vector<1x128xf32>
      %c0_19 = arith.constant 0 : index
      %c0_20 = arith.constant 0 : index
      %29 = vector.load %arg5[%c0_19, %c0_20] : memref<1x128xf32, #tpu.memory_space<vmem>>, vector<1x128xf32>
      %cst_21 = arith.constant 9.99999974E-6 : f32
      %30 = vector.broadcast %cst_21 : f32 to vector<1x128xf32>
      %31 = arith.addf %28, %30 : vector<1x128xf32>
      %32 = math.rsqrt %31 : vector<1x128xf32>
      %33 = arith.mulf %29, %32 : vector<1x128xf32>
      %c0_22 = arith.constant 0 : index
      %c0_23 = arith.constant 0 : index
      %34 = vector.load %arg6[%c0_22, %c0_23] : memref<1x128xf32, #tpu.memory_space<vmem>>, vector<1x128xf32>
      %35 = arith.mulf %23, %33 : vector<1x128xf32>
      %36 = arith.subf %34, %35 : vector<1x128xf32>
      %c0_24 = arith.constant 0 : index
      %c0_25 = arith.constant 0 : index
      %37 = vector.load %arg8[%c0_24, %c0_25] : memref<1x128xf32, #tpu.memory_space<vmem>>, vector<1x128xf32>
      tpu.vector_store %arg8[%c0_24, %c0_25], %33 {strides = array<i32>} : memref<1x128xf32, #tpu.memory_space<vmem>>, vector<1x128xf32>,
      %c0_26 = arith.constant 0 : index
      %c0_27 = arith.constant 0 : index
      %38 = vector.load %arg9[%c0_26, %c0_27] : memref<1x128xf32, #tpu.memory_space<vmem>>, vector<1x128xf32>
      tpu.vector_store %arg9[%c0_26, %c0_27], %36 {strides = array<i32>} : memref<1x128xf32, #tpu.memory_space<vmem>>, vector<1x128xf32>,
    } else {
    }
    %c1_i32_11 = arith.constant 1 : i32
    %18 = arith.cmpi eq, %arg0, %c1_i32_11 : i32
    %19 = arith.extui %18 : i1 to i32
    %c0_i32_12 = arith.constant 0 : i32
    %20 = arith.cmpi ne, %19, %c0_i32_12 : i32
    scf.if %20 {
      %c0_13 = arith.constant 0 : index
      %c0_14 = arith.constant 0 : index
      %21 = vector.load %arg8[%c0_13, %c0_14] : memref<1x128xf32, #tpu.memory_space<vmem>>, vector<1x128xf32>
      %22 = vector.broadcast %21 : vector<1x128xf32> to vector<8x128xf32>
      %23 = arith.mulf %4, %22 : vector<8x128xf32>
      %c0_15 = arith.constant 0 : index
      %c0_16 = arith.constant 0 : index
      %24 = vector.load %arg9[%c0_15, %c0_16] : memref<1x128xf32, #tpu.memory_space<vmem>>, vector<1x128xf32>
      %25 = vector.broadcast %24 : vector<1x128xf32> to vector<8x128xf32>
      %26 = arith.addf %23, %25 : vector<8x128xf32>
      %27 = math.tanh %26 : vector<8x128xf32>
      %c0_17 = arith.constant 0 : index
      %c0_18 = arith.constant 0 : index
      %28 = vector.load %arg7[%c0_17, %c0_18] : memref<8x128xf32, #tpu.memory_space<vmem>>, vector<8x128xf32>
      tpu.vector_store %arg7[%c0_17, %c0_18], %27 {strides = array<i32>} : memref<8x128xf32, #tpu.memory_space<vmem>>, vector<8x128xf32>,
    } else {
    }
    return
  }
  func.func @transform_0(%arg0: i32, %arg1: i32) -> (i32, i32) {
    %c0_i32 = arith.constant 0 : i32
    %c0_i32_0 = arith.constant 0 : i32
    return %arg1, %c0_i32 : i32, i32
  }
  func.func @transform_1(%arg0: i32, %arg1: i32) -> (i32, i32) {
    %c0_i32 = arith.constant 0 : i32
    %c0_i32_0 = arith.constant 0 : i32
    return %arg1, %c0_i32 : i32, i32
  }
  func.func @transform_2(%arg0: i32, %arg1: i32) -> (i32, i32) {
    %c0_i32 = arith.constant 0 : i32
    %c0_i32_0 = arith.constant 0 : i32
    %c0_i32_1 = arith.constant 0 : i32
    return %c0_i32, %c0_i32_0 : i32, i32
  }
  func.func @transform_3(%arg0: i32, %arg1: i32) -> (i32, i32) {
    %c0_i32 = arith.constant 0 : i32
    %c0_i32_0 = arith.constant 0 : i32
    %c0_i32_1 = arith.constant 0 : i32
    return %c0_i32, %c0_i32_0 : i32, i32
  }
  func.func @transform_4(%arg0: i32, %arg1: i32) -> (i32, i32) {
    %c0_i32 = arith.constant 0 : i32
    %c0_i32_0 = arith.constant 0 : i32
    %c0_i32_1 = arith.constant 0 : i32
    return %c0_i32, %c0_i32_0 : i32, i32
  }
  func.func @transform_5(%arg0: i32, %arg1: i32) -> (i32, i32) {
    %0 = arith.muli %arg1, %arg0 : i32
    %c0_i32 = arith.constant 0 : i32
    %c0_i32_0 = arith.constant 0 : i32
    return %0, %c0_i32 : i32, i32
  }
}

</mosaic_0001>

<llo_original>
// kernel: tpu_custom_call.1
$region0: #{tpu_custom_call.1}
  #allocation0 [shape = 'u32[]', space=smem, size = 0x4, offset = 0x4, fixed_abs, tag = 'smem constant byte address 0x4 - core index']
  #allocation1 [shape = 'u32[144,128]{1,0:T(1,128)}', space=vmem, size = 0x12000, scoped, tag = 'internal scratch']
  #allocation2 [shape = 'f32[1,128]{1,0:T(1,128)}', space=vmem, size = 0x200, scoped, tag = 'scratch operand']
  #allocation3 [shape = 'f32[1,128]{1,0:T(1,128)}', space=vmem, size = 0x200, scoped, tag = 'scratch operand']
  %s0 = inlined_call_operand.hbm [shape: f32[8,32], index: 0, kind: input, shape index: {}]
  %s1 = inlined_call_operand.hbm [shape: f32[8,32], index: 1, kind: input, shape index: {}]
  %s2 = inlined_call_operand.hbm [shape: f32[32,128], index: 2, kind: input, shape index: {}]
  %s3 = inlined_call_operand.vmem [shape: f32[1,128], index: 3, kind: input, shape index: {}]
  %s4 = inlined_call_operand.vmem [shape: f32[1,128], index: 4, kind: input, shape index: {}]
  %s5 = inlined_call_operand.hbm [shape: f32[8,128], index: 5, kind: output, shape index: {}]
  %s6 = sld [smem:[#allocation0]]
  $region81: #{tpu_custom_call.1} parent=0
    _
  %s8 = ssub.s32 1, %s6
  %s9 = scalar_select 0, %s8, %s6
  $region1: #{tpu_custom_call.1} parent=0
    #allocation4 [shape = 'u8[4096]{0}', space=vmem, size = 0x1000, scoped, tag = 'input window, operand 0, single buffered']
    #allocation5 [shape = 's32[2]{0}', space=sflag, size = 0x8, scoped, tag = 'scoped memory for tpu_custom_call.1']
    #allocation6 [shape = 's32[2]{0}', space=sflag, size = 0x8, scoped, tag = 'scoped memory for tpu_custom_call.1']
    #allocation7 [shape = 'u8[4096]{0}', space=vmem, size = 0x1000, scoped, tag = 'input window, operand 1, single buffered']
    #allocation8 [shape = 's32[1]{0}', space=sflag, size = 0x4, scoped, tag = 'scoped memory for tpu_custom_call.1']
    #allocation9 [shape = 'u8[16384]{0}', space=vmem, size = 0x4000, scoped, tag = 'input window, operand 2, single buffered']
    #allocation10 [shape = 'u8[8192]{0}', space=vmem, size = 0x2000, scoped, tag = 'output window, operand 0']
    %10 = vsyncpa [#allocation5], 0
    %11 = vsyncpa [#allocation8], 0
    %12 = vsyncpa [#allocation6], 0
    %s13 = scalar_lea.sflag [#allocation6], 1
    %14 = vsyncpa %s13, 0
    loop: start=0, step=1, limit=4
    $region2: #{tpu_custom_call.1} parent=1 // loop_pre_header
      _
    $region3: #{tpu_custom_call.1} parent=1 // loop_header
      %s16 = sphi 0, %s20
      %p17 = scmp.ge.s32.totalorder %s16, 4
      %s23 = sphi 0, %s35
      %s24 = sphi 0, %s31
      %s25 = sphi 0, %s23
      %s26 = sphi 0, %s24
      %s27 = sphi 0, %s25
      %s28 = sphi 0, %s26
      %s38 = sphi 0, %s40
      %s41 = sphi 0, %s38
      %s42 = sphi 0, %s41
      %s58 = sphi 0, %s42
      %s64 = sphi 0, %s66
      %s67 = sphi 0, %s64
      %s68 = sphi 0, %s67
      %s84 = sphi 0, %s68
      %s88 = sphi 0, %s88
      %s90 = sphi 0, %s88
      %s91 = sphi 0, %s90
      %s105 = sphi 0, %s91
      %s109 = sphi 0, %s109
      %s111 = sphi 0, %s109
      %s112 = sphi 0, %s111
      %s126 = sphi 0, %s112
      %s130 = sphi 0, %s130
      %s132 = sphi 0, %s130
      %s133 = sphi 0, %s132
      %s147 = sphi 0, %s133
      %s155 = sphi 0, %s157
      %s158 = sphi 0, %s155
      %s159 = sphi 0, %s158
      %s175 = sphi 0, %s159
    $region4: #{tpu_custom_call.1} parent=1 // loop_header_branch
      %19 = sbr.rel (%p17) target = $region8
    $region5: #{tpu_custom_call.1} parent=1 // loop_body
      %s21 = ssub.s32 %s16, 1
      %s22 = ssub.s32 %s16, 2
      %s29 = sadd.s32 1, %s24
      %p30 = scmp.ge.s32.totalorder %s29, 1
      %s31 = scalar_select %p30, 0, %s29
      %s32 = sadd.s32 1, %s23
      %s33 = scalar_select %p30, %s32, %s23
      %p34 = scmp.ge.s32.totalorder %s33, 2
      %s35 = scalar_select %p34, 0, %s33
      %s36 = ssub.s32 %s24, %s31
      %p37 = scmp.eq.s32.totalorder %s36, 0
      %s39 = sadd.s32 %s38, 1
      %s40 = scalar_select %p37, %s38, %s39
      %p43 = pneg %p37
      %p44 = scmp.eq.s32.totalorder %s16, 1
      %p45 = por %p43, %p44
      %p46 = scmp.ne.s32.totalorder %s38, %s41
      %p47 = scmp.eq.s32.totalorder %s16, 0
      %p48 = por %p46, %p47
      %p49 = scmp.ne.s32.totalorder %s38, %s41
      %p50 = scmp.eq.s32.totalorder %s21, 1
      %p51 = por %p49, %p50
      %p52 = scmp.ne.s32.totalorder %s41, %s42
      %p53 = scmp.eq.s32.totalorder %s21, 0
      %p54 = por %p52, %p53
      %p55 = scmp.ne.s32.totalorder %s41, %s42
      %p56 = scmp.eq.s32.totalorder %s22, 1
      %p57 = por %p55, %p56
      %p59 = scmp.ne.s32.totalorder %s42, %s58
      %p60 = scmp.eq.s32.totalorder %s22, 0
      %p61 = por %p59, %p60
      %s62 = ssub.s32 %s24, %s31
      %p63 = scmp.eq.s32.totalorder %s62, 0
      %s65 = sadd.s32 %s64, 1
      %s66 = scalar_select %p63, %s64, %s65
      %p69 = pneg %p63
      %p70 = scmp.eq.s32.totalorder %s16, 1
      %p71 = por %p69, %p70
      %p72 = scmp.ne.s32.totalorder %s64, %s67
      %p73 = scmp.eq.s32.totalorder %s16, 0
      %p74 = por %p72, %p73
      %p75 = scmp.ne.s32.totalorder %s64, %s67
      %p76 = scmp.eq.s32.totalorder %s21, 1
      %p77 = por %p75, %p76
      %p78 = scmp.ne.s32.totalorder %s67, %s68
      %p79 = scmp.eq.s32.totalorder %s21, 0
      %p80 = por %p78, %p79
      %p81 = scmp.ne.s32.totalorder %s67, %s68
      %p82 = scmp.eq.s32.totalorder %s22, 1
      %p83 = por %p81, %p82
      %p85 = scmp.ne.s32.totalorder %s68, %s84
      %p86 = scmp.eq.s32.totalorder %s22, 0
      %p87 = por %p85, %p86
      %s89 = sadd.s32 %s88, 1
      %p92 = scmp.eq.s32.totalorder %s16, 1
      %p93 = scmp.ne.s32.totalorder %s88, %s90
      %p94 = scmp.eq.s32.totalorder %s16, 0
      %p95 = por %p93, %p94
      %p96 = scmp.ne.s32.totalorder %s88, %s90
      %p97 = scmp.eq.s32.totalorder %s21, 1
      %p98 = por %p96, %p97
      %p99 = scmp.ne.s32.totalorder %s90, %s91
      %p100 = scmp.eq.s32.totalorder %s21, 0
      %p101 = por %p99, %p100
      %p102 = scmp.ne.s32.totalorder %s90, %s91
      %p103 = scmp.eq.s32.totalorder %s22, 1
      %p104 = por %p102, %p103
      %p106 = scmp.ne.s32.totalorder %s91, %s105
      %p107 = scmp.eq.s32.totalorder %s22, 0
      %p108 = por %p106, %p107
      %s110 = sadd.s32 %s109, 1
      %p113 = scmp.eq.s32.totalorder %s16, 1
      %p114 = scmp.ne.s32.totalorder %s109, %s111
      %p115 = scmp.eq.s32.totalorder %s16, 0
      %p116 = por %p114, %p115
      %p117 = scmp.ne.s32.totalorder %s109, %s111
      %p118 = scmp.eq.s32.totalorder %s21, 1
      %p119 = por %p117, %p118
      %p120 = scmp.ne.s32.totalorder %s111, %s112
      %p121 = scmp.eq.s32.totalorder %s21, 0
      %p122 = por %p120, %p121
      %p123 = scmp.ne.s32.totalorder %s111, %s112
      %p124 = scmp.eq.s32.totalorder %s22, 1
      %p125 = por %p123, %p124
      %p127 = scmp.ne.s32.totalorder %s112, %s126
      %p128 = scmp.eq.s32.totalorder %s22, 0
      %p129 = por %p127, %p128
      %s131 = sadd.s32 %s130, 1
      %p134 = scmp.eq.s32.totalorder %s16, 1
      %p135 = scmp.ne.s32.totalorder %s130, %s132
      %p136 = scmp.eq.s32.totalorder %s16, 0
      %p137 = por %p135, %p136
      %p138 = scmp.ne.s32.totalorder %s130, %s132
      %p139 = scmp.eq.s32.totalorder %s21, 1
      %p140 = por %p138, %p139
      %p141 = scmp.ne.s32.totalorder %s132, %s133
      %p142 = scmp.eq.s32.totalorder %s21, 0
      %p143 = por %p141, %p142
      %p144 = scmp.ne.s32.totalorder %s132, %s133
      %p145 = scmp.eq.s32.totalorder %s22, 1
      %p146 = por %p144, %p145
      %p148 = scmp.ne.s32.totalorder %s133, %s147
      %p149 = scmp.eq.s32.totalorder %s22, 0
      %p150 = por %p148, %p149
      %s151 = smul.u32 %s24, %s23
      %s152 = smul.u32 %s31, %s35
      %s153 = ssub.s32 %s151, %s152
      %p154 = scmp.eq.s32.totalorder %s153, 0
      %s156 = sadd.s32 %s155, 1
      %s157 = scalar_select %p154, %s155, %s156
      %p160 = pneg %p154
      %p161 = scmp.eq.s32.totalorder %s16, 1
      %p162 = por %p160, %p161
      %p163 = scmp.ne.s32.totalorder %s155, %s158
      %p164 = scmp.eq.s32.totalorder %s16, 0
      %p165 = por %p163, %p164
      %p166 = scmp.ne.s32.totalorder %s155, %s158
      %p167 = scmp.eq.s32.totalorder %s21, 1
      %p168 = por %p166, %p167
      %p169 = scmp.ne.s32.totalorder %s158, %s159
      %p170 = scmp.eq.s32.totalorder %s21, 0
      %p171 = por %p169, %p170
      %p172 = scmp.ne.s32.totalorder %s158, %s159
      %p173 = scmp.eq.s32.totalorder %s22, 1
      %p174 = por %p172, %p173
      %p176 = scmp.ne.s32.totalorder %s159, %s175
      %p177 = scmp.eq.s32.totalorder %s22, 0
      %p178 = por %p176, %p177
      %p179 = scmp.le.s32.totalorder 1, %s16
      %p180 = scmp.lt.s32.totalorder %s16, 3
      %p181 = pnand %p179, %p180
      %p182 = pneg %p181
      // Predicated region
      $region9: #{tpu_custom_call.1} parent=5 // pred_check
        _
      $region10: #{tpu_custom_call.1} parent=5 // pred_check_branch
        %184 = sbr.rel (%p181) target = $region12
      $region11: #{tpu_custom_call.1} parent=5 // pred_region
        %s185 = ssub.s32 %s16, 1
        // Predicated region
        $region13: #{tpu_custom_call.1} parent=11 // pred_check
          %p186 = pneg %p54
        $region14: #{tpu_custom_call.1} parent=11 // pred_check_branch
          %188 = sbr.rel (%p186) target = $region16
        $region15: #{tpu_custom_call.1} parent=11 // pred_region
          %s190 = ssub.s32 128, 128
          %191 = vsyncadd [#allocation5], %s190
          %s192 = smul.addr %s26, 128
          %s193 = scalar_lea.hbm %s0, %s192
          %s195 = sshll.u32 [#allocation4], 4
          %s196 = int_to_ptr.vmem [resolvable:$true] %s195
          %198 = dma.hbm_to_vmem [thread:$0]  %s193, 128, %s196, [#allocation5]
        $region16: #{tpu_custom_call.1} parent=11 // pred_fallthru
          _
        // Predicated region
        $region17: #{tpu_custom_call.1} parent=11 // pred_check
          %p199 = pneg %p80
        $region18: #{tpu_custom_call.1} parent=11 // pred_check_branch
          %201 = sbr.rel (%p199) target = $region20
        $region19: #{tpu_custom_call.1} parent=11 // pred_region
          %s203 = ssub.s32 128, 128
          %204 = vsyncadd [#allocation8], %s203
          %s205 = smul.addr %s26, 128
          %s206 = scalar_lea.hbm %s1, %s205
          %s208 = sshll.u32 [#allocation7], 4
          %s209 = int_to_ptr.vmem [resolvable:$true] %s208
          %211 = dma.hbm_to_vmem [thread:$0]  %s206, 128, %s209, [#allocation8]
        $region20: #{tpu_custom_call.1} parent=11 // pred_fallthru
          _
        // Predicated region
        $region21: #{tpu_custom_call.1} parent=11 // pred_check
          %p212 = pneg %p101
        $region22: #{tpu_custom_call.1} parent=11 // pred_check_branch
          %214 = sbr.rel (%p212) target = $region24
        $region23: #{tpu_custom_call.1} parent=11 // pred_region
          %s216 = ssub.s32 512, 512
          %217 = vsyncadd [#allocation8], %s216
          %s218 = sshll.u32 [#allocation9], 4
          %s219 = int_to_ptr.vmem [resolvable:$true] %s218
          %224 = dma.hbm_to_vmem [thread:$0]  %s2, 512, %s219, [#allocation8], 128, 128, 8
        $region24: #{tpu_custom_call.1} parent=11 // pred_fallthru
          _
        // Predicated region
        $region25: #{tpu_custom_call.1} parent=11 // pred_check
          %p225 = pneg %p122
        $region26: #{tpu_custom_call.1} parent=11 // pred_check_branch
          %227 = sbr.rel (%p225) target = $region28
        $region27: #{tpu_custom_call.1} parent=11 // pred_region
          _
        $region28: #{tpu_custom_call.1} parent=11 // pred_fallthru
          _
        // Predicated region
        $region29: #{tpu_custom_call.1} parent=11 // pred_check
          %p228 = pneg %p143
        $region30: #{tpu_custom_call.1} parent=11 // pred_check_branch
          %230 = sbr.rel (%p228) target = $region32
        $region31: #{tpu_custom_call.1} parent=11 // pred_region
          _
        $region32: #{tpu_custom_call.1} parent=11 // pred_fallthru
          _
      $region12: #{tpu_custom_call.1} parent=5 // pred_fallthru
        _
      %p231 = scmp.lt.s32.totalorder %s16, 2
      // Predicated region
      $region33: #{tpu_custom_call.1} parent=5 // pred_check
        %p232 = pneg %p231
      $region34: #{tpu_custom_call.1} parent=5 // pred_check_branch
        %234 = sbr.rel (%p232) target = $region36
      $region35: #{tpu_custom_call.1} parent=5 // pred_region
        _
      $region36: #{tpu_custom_call.1} parent=5 // pred_fallthru
        _
      %p235 = scmp.le.s32.totalorder 1, %s16
      %p236 = scmp.lt.s32.totalorder %s16, 3
      %p237 = pnand %p235, %p236
      %p238 = pneg %p237
      // Predicated region
      $region37: #{tpu_custom_call.1} parent=5 // pred_check
        _
      $region38: #{tpu_custom_call.1} parent=5 // pred_check_branch
        %240 = sbr.rel (%p237) target = $region40
      $region39: #{tpu_custom_call.1} parent=5 // pred_region
        %s241 = ssub.s32 %s16, 1
        // Predicated region
        $region41: #{tpu_custom_call.1} parent=39 // pred_check
          %p242 = pneg %p54
        $region42: #{tpu_custom_call.1} parent=39 // pred_check_branch
          %244 = sbr.rel (%p242) target = $region44
        $region43: #{tpu_custom_call.1} parent=39 // pred_region
          %245 = dma.done [#allocation5], 128
        $region44: #{tpu_custom_call.1} parent=39 // pred_fallthru
          _
        // Predicated region
        $region45: #{tpu_custom_call.1} parent=39 // pred_check
          %p246 = pneg %p80
        $region46: #{tpu_custom_call.1} parent=39 // pred_check_branch
          %248 = sbr.rel (%p246) target = $region48
        $region47: #{tpu_custom_call.1} parent=39 // pred_region
          %249 = dma.done [#allocation8], 128
        $region48: #{tpu_custom_call.1} parent=39 // pred_fallthru
          _
        // Predicated region
        $region49: #{tpu_custom_call.1} parent=39 // pred_check
          %p250 = pneg %p101
        $region50: #{tpu_custom_call.1} parent=39 // pred_check_branch
          %252 = sbr.rel (%p250) target = $region52
        $region51: #{tpu_custom_call.1} parent=39 // pred_region
          %253 = dma.done [#allocation8], 512
        $region52: #{tpu_custom_call.1} parent=39 // pred_fallthru
          _
        %p254 = pneg %p54
        %p255 = pneg %p51
        %p256 = pneg %p80
        %p257 = pneg %p77
        %p258 = pneg %p101
        %p259 = pneg %p98
        %p260 = pneg %p122
        %p261 = pneg %p119
        %p262 = pneg %p143
        %p263 = pneg %p140
        %p264 = pneg %p171
        %p265 = pneg %p168
        %s266 = sand.u32 %s158, 1
        %s267 = scalar_lea.sflag [#allocation6], %s266
        %s268 = sand.u32 %s158, 1
        %s269 = smul.addr %s268, 8
        %s270 = scalar_lea.vmem [#allocation10], %s269
        %s271 = smul.u32 %s26, %s25
        %v272 = vld [vmem:[#allocation4] sm:$0xff]
        %v273 = vld [vmem:[#allocation7] sm:$0xff]
        %v274 = vadd.f32 %v272, %v273
        %v275 = vld [vmem:[#allocation9] sm:$0xff]
        %v276 = vld [vmem:[#allocation9 + $0x8] sm:$0xff]
        %v277 = vld [vmem:[#allocation9 + $0x10] sm:$0xff]
        %v278 = vld [vmem:[#allocation9 + $0x18] sm:$0xff]
        %vm279 = vcmask 261120
        %v281 = vsel %vm279, %v274, 0
        %283 = vmatprep.subr.mxu0 0.0
        %284 = vmatpush1.msra.mxu0 %v275
        %285 = vmatprep.subr.mxu0 0.0
        %286 = vmatpush1.msra.mxu0 %v276
        %287 = vmatprep.subr.mxu0 0.0
        %288 = vmatpush1.msra.mxu0 %v277
        %289 = vmatprep.subr.mxu0 0.0
        %290 = vmatpush1.msra.mxu0 %v278
        %291 = vmatprep.subr.mxu0 0.0
        %292 = vmatpush1.msra.mxu0 0.0
        %293 = vmatprep.subr.mxu0 0.0
        %294 = vmatpush1.msra.mxu0 0.0
        %295 = vmatprep.subr.mxu0 0.0
        %296 = vmatpush1.msra.mxu0 0.0
        %297 = vmatprep.subr.mxu0 0.0
        %298 = vmatpush1.msra.mxu0 0.0
        %299 = vmatprep.subr.mxu0 0.0
        %300 = vmatpush1.msra.mxu0 0.0
        %301 = vmatprep.subr.mxu0 0.0
        %302 = vmatpush1.msra.mxu0 0.0
        %303 = vmatprep.subr.mxu0 0.0
        %304 = vmatpush1.msra.mxu0 0.0
        %305 = vmatprep.subr.mxu0 0.0
        %306 = vmatpush1.msra.mxu0 0.0
        %307 = vmatprep.subr.mxu0 0.0
        %308 = vmatpush1.msra.mxu0 0.0
        %309 = vmatprep.subr.mxu0 0.0
        %310 = vmatpush1.msra.mxu0 0.0
        %311 = vmatprep.subr.mxu0 0.0
        %312 = vmatpush1.msra.mxu0 0.0
        %313 = vmatprep.subr.mxu0 0.0
        %314 = vmatpush1.msra.mxu0 0.0
        %315 = vmatprep.subr.mxu0 0.0
        %316 = vmatpush1.msra.mxu0 0.0
        %317 = vmatprep.subr.mxu0 0.0
        %318 = vmatpush1.msra.mxu0 0.0
        %319 = vmatprep.subr.mxu0 0.0
        %320 = vmatpush1.msra.mxu0 0.0
        %321 = vmatprep.subr.mxu0 0.0
        %322 = vmatpush1.msra.mxu0 0.0
        %323 = vmatprep.subr.mxu0 0.0
        %324 = vmatpush1.msra.mxu0 0.0
        %325 = vmatprep.subr.mxu0 0.0
        %326 = vmatpush1.msra.mxu0 0.0
        %327 = vmatprep.subr.mxu0 0.0
        %328 = vmatpush1.msra.mxu0 0.0
        %329 = vmatprep.subr.mxu0 0.0
        %330 = vmatpush1.msra.mxu0 0.0
        %331 = vmatprep.subr.mxu0 0.0
        %332 = vmatpush1.msra.mxu0 0.0
        %333 = vmatprep.subr.mxu0 0.0
        %334 = vmatpush1.msra.mxu0 0.0
        %335 = vmatprep.subr.mxu0 0.0
        %336 = vmatpush1.msra.mxu0 0.0
        %337 = vmatprep.subr.mxu0 0.0
        %338 = vmatpush1.msra.mxu0 0.0
        %339 = vmatprep.subr.mxu0 0.0
        %340 = vmatpush1.msra.mxu0 0.0
        %341 = vmatprep.subr.mxu0 0.0
        %342 = vmatpush1.msra.mxu0 0.0
        %343 = vmatprep.subr.mxu0 0.0
        %344 = vmatpush1.msra.mxu0 0.0
        %345 = vmatprep.subr.mxu0 0.0
        %346 = vmatpush1.msra.mxu0 0.0
        %347 = vmatprep.mubr.f32.mxu0 0.0
        %348 = vmatmul.mubr.f32.gmra.mrb[0].mxu0 %v281
        %v349 = vpop.f32.mrb[0].mxu0
        %v350 = vadd.f32 0.0, %v349
        %v351 = vpop.f32.mrb[0].mxu0
        %352 = vdwg.mxu0
        %p353 = scmp.eq.s32.totalorder %s25, 0
        %p354 = scmp.eq.s32.totalorder %s26, 0
        %p355 = pnand %p353, %p354
        %p356 = pneg %p355
        // Predicated region
        $region53: #{tpu_custom_call.1} parent=39 // pred_check
          _
        $region54: #{tpu_custom_call.1} parent=39 // pred_check_branch
          %358 = sbr.rel (%p355) target = $region56
        $region55: #{tpu_custom_call.1} parent=39 // pred_region
          %359 = vst [vmem:[#allocation2] sm:$0x1] 0.0
          %360 = vst [vmem:[#allocation3] sm:$0x1] 0.0
        $region56: #{tpu_custom_call.1} parent=39 // pred_fallthru
          _
        // Predicated region
        $region57: #{tpu_custom_call.1} parent=39 // pred_check
          %p361 = pneg %p353
        $region58: #{tpu_custom_call.1} parent=39 // pred_check_branch
          %363 = sbr.rel (%p361) target = $region60
        $region59: #{tpu_custom_call.1} parent=39 // pred_region
          %v364 = vld [vmem:[#allocation2] sm:$0x1]
          %v365 = vrot.slane %v350, 4
          %v366 = vadd.f32 %v350, %v365
          %v367 = vrot.slane %v366, 2
          %v368 = vadd.f32 %v366, %v367
          %v369 = vrot.slane %v368, 1
          %v370 = vadd.f32 %v368, %v369
          %v371 = vadd.f32 %v364, %v370
          %372 = vst [vmem:[#allocation2] sm:$0x1] %v371
          %v373 = vld [vmem:[#allocation3] sm:$0x1]
          %v374 = vmul.f32 %v350, %v350
          %v375 = vrot.slane %v374, 4
          %v376 = vadd.f32 %v374, %v375
          %v377 = vrot.slane %v376, 2
          %v378 = vadd.f32 %v376, %v377
          %v379 = vrot.slane %v378, 1
          %v380 = vadd.f32 %v378, %v379
          %v381 = vadd.f32 %v373, %v380
          %382 = vst [vmem:[#allocation3] sm:$0x1] %v381
        $region60: #{tpu_custom_call.1} parent=39 // pred_fallthru
          _
        %p383 = scmp.eq.s32.totalorder %s25, 1
        %p384 = pnand %p383, %p354
        %p385 = pneg %p384
        // Predicated region
        $region61: #{tpu_custom_call.1} parent=39 // pred_check
          _
        $region62: #{tpu_custom_call.1} parent=39 // pred_check_branch
          %387 = sbr.rel (%p384) target = $region64
        $region63: #{tpu_custom_call.1} parent=39 // pred_region
          %v388 = vld [vmem:[#allocation2] sm:$0x1]
          %v389 = vmul.f32 %v388, 0.125
          %v390 = vld [vmem:[#allocation3] sm:$0x1]
          %v391 = vmul.f32 %v390, 0.125
          %v392 = vmul.f32 %v389, %v389
          %v393 = vsub.f32 %v391, %v392
          %v394 = vld [vmem:[%s3] sm:$0x1]
          %v395 = vadd.f32 %v393, 1e-05
          %v396 = vrsqrt.pop %v395
          %v397 = vmul.f32 %v394, %v396
          %v398 = vld [vmem:[%s4] sm:$0x1]
          %v399 = vmul.f32 %v389, %v397
          %v400 = vsub.f32 %v398, %v399
          %401 = vst [vmem:[#allocation2] sm:$0x1] %v397
          %402 = vst [vmem:[#allocation3] sm:$0x1] %v400
        $region64: #{tpu_custom_call.1} parent=39 // pred_fallthru
          _
        // Predicated region
        $region65: #{tpu_custom_call.1} parent=39 // pred_check
          %p403 = pneg %p383
        $region66: #{tpu_custom_call.1} parent=39 // pred_check_branch
          %405 = sbr.rel (%p403) target = $region68
        $region67: #{tpu_custom_call.1} parent=39 // pred_region
          %v406 = vld [vmem:[#allocation2] sm:$0x1]
          %v408 = vlaneseq
          %v409 = vshrl.u32 %v408, 7
          %v410 = vsub.s32 0, %v409
          %v411 = vrot.slane %v406, %v410
          %v413 = vmul.f32 %v350, %v411
          %v414 = vld [vmem:[#allocation3] sm:$0x1]
          %v416 = vlaneseq
          %v417 = vshrl.u32 %v416, 7
          %v418 = vsub.s32 0, %v417
          %v419 = vrot.slane %v414, %v418
          %v421 = vadd.f32 %v413, %v419
          %v422 = vtanh.pop %v421
          %423 = vst [vmem:[%s270] sm:$0xff] %v422
        $region68: #{tpu_custom_call.1} parent=39 // pred_fallthru
          _
        %s424 = sand.u32 %s158, 1
        %s425 = scalar_lea.sflag [#allocation6], %s424
        %s426 = sand.u32 %s158, 1
        %s427 = smul.addr %s426, 8
        %s428 = scalar_lea.vmem [#allocation10], %s427
        // Predicated region
        $region69: #{tpu_custom_call.1} parent=39 // pred_check
          %p429 = pneg %p168
        $region70: #{tpu_custom_call.1} parent=39 // pred_check_branch
          %431 = sbr.rel (%p429) target = $region72
        $region71: #{tpu_custom_call.1} parent=39 // pred_region
          %s432 = smul.u32 %s26, %s25
          %s434 = ssub.s32 128, 128
          %435 = vsyncadd %s425, %s434
          %s436 = smul.addr %s432, 128
          %s437 = scalar_lea.hbm %s5, %s436
          %s439 = sshll.u32 %s428, 4
          %s440 = int_to_ptr.vmem [resolvable:$true] %s439
          %442 = dma.vmem_to_hbm [thread:$0]  %s440, 128, %s437, %s425
        $region72: #{tpu_custom_call.1} parent=39 // pred_fallthru
          _
      $region40: #{tpu_custom_call.1} parent=5 // pred_fallthru
        _
      %p443 = scmp.le.s32.totalorder 2, %s16
      // Predicated region
      $region73: #{tpu_custom_call.1} parent=5 // pred_check
        %p444 = pneg %p443
      $region74: #{tpu_custom_call.1} parent=5 // pred_check_branch
        %446 = sbr.rel (%p444) target = $region76
      $region75: #{tpu_custom_call.1} parent=5 // pred_region
        %s447 = ssub.s32 %s16, 2
        // Predicated region
        $region77: #{tpu_custom_call.1} parent=75 // pred_check
          %p448 = pneg %p174
        $region78: #{tpu_custom_call.1} parent=75 // pred_check_branch
          %450 = sbr.rel (%p448) target = $region80
        $region79: #{tpu_custom_call.1} parent=75 // pred_region
          %s451 = sand.u32 %s159, 1
          %s452 = scalar_lea.sflag [#allocation6], %s451
          %s453 = sand.u32 %s159, 1
          %s454 = smul.addr %s453, 8
          %s455 = scalar_lea.vmem [#allocation10], %s454
          %456 = dma.done %s452, 128
        $region80: #{tpu_custom_call.1} parent=75 // pred_fallthru
          _
      $region76: #{tpu_custom_call.1} parent=5 // pred_fallthru
        _
    $region6: #{tpu_custom_call.1} parent=1 // loop_footer
      %s20 = sadd.s32 1, %s16
    $region7: #{tpu_custom_call.1} parent=1 // loop_footer_branch
      %15 = sbr.rel target = $region3
    $region8: #{tpu_custom_call.1} parent=1 // loop_exit
      _
    %457 = vsyncpa [#allocation5], 1
    %s458 = scalar_lea.sflag [#allocation5], 1
    %459 = vsyncpa %s458, 1
    %460 = vsyncpa [#allocation8], 1
    %461 = vsyncpa [#allocation6], 1
    %s462 = scalar_lea.sflag [#allocation6], 1
    %463 = vsyncpa %s462, 1

</llo_original>
